<compile_context>
chip_gen: v6e
topology: v6e:2x2x1
jax: 0.10.0
libtpu: 0.0.40
codegen_flags: <defaults>
</compile_context>

<pallas_src>
import math

import jax
import jax.numpy as jnp
from jax.experimental import pallas as pl
from jax.experimental.pallas import tpu as pltpu

D_MODEL = 64
HIDDEN = 4 * D_MODEL  # 256


def _ffn_kernel(x_ref, w1_ref, b1_ref, w2_ref, b2_ref, o_ref):
    """Fused Linear -> ReLU -> Linear on one lane-dense packed row tile.

    x_ref : (Tp, 2*C)   two logical 64-wide rows packed per 128-lane row
    w1_ref: (2*C, 2*H)  block-diag(W1, W1), VMEM-resident
    b1_ref: (1, 2*H)    f32
    w2_ref: (2*H, 2*C)  block-diag(W2, W2), VMEM-resident
    b2_ref: (1, 2*C)    f32
    o_ref : (Tp, 2*C)   lane-dense packed output
    """
    x = x_ref[...]
    h = jnp.dot(x, w1_ref[...], preferred_element_type=jnp.float32)    # (Tp, 2H) f32 acc
    h = jnp.maximum(h + b1_ref[...], 0.0)                              # bias + ReLU in f32
    h = h.astype(w2_ref.dtype)                                         # bf16 MXU operands when input is bf16
    y = jnp.dot(h, w2_ref[...], preferred_element_type=jnp.float32)    # (Tp, 2C) f32 acc
    o_ref[...] = (y + b2_ref[...]).astype(o_ref.dtype)


def _block_diag2(w):
    """[[w, 0], [0, w]] so one lane-dense matmul handles two packed rows."""
    z = jnp.zeros_like(w)
    return jnp.concatenate(
        [jnp.concatenate([w, z], axis=1), jnp.concatenate([z, w], axis=1)], axis=0)


def ffn_forward(x, w1_t, b1, w2_t, b2, *, block_rows=2048):
    """FeedforwardNetwork forward (eval mode).

    x: (B, T, C); w1_t: (C, 4C); b1: (4C,); w2_t: (4C, C); b2: (C,).
    Weights are pre-transposed ([in_features, out_features]) so the kernel
    computes x @ W directly on the MXU.  Output dtype == x.dtype.
    """
    B, T, C = x.shape
    assert C == D_MODEL
    M = B * T
    out_dtype = x.dtype
    compute_dtype = x.dtype
    comp_bytes = jnp.dtype(compute_dtype).itemsize
    out_bytes = jnp.dtype(out_dtype).itemsize

    # Lane-dense packing: (M, 64) row-major == (M//2, 128); reshapes are free bitcasts.
    x2 = x.reshape(M, C)
    Mp = (M + 1) // 2
    if M % 2:
        # TODO(synk): one-row pad copy only for odd B*T (rare); even M costs nothing.
        x2 = jnp.pad(x2, ((0, 1), (0, 0)))
    xp = x2.reshape(Mp, 2 * C).astype(compute_dtype)

    # Paired-row block-diagonal weights (exact same math as the plain MLP).
    w1s = _block_diag2(w1_t).astype(compute_dtype)                       # (128, 512)
    w2s = _block_diag2(w2_t).astype(compute_dtype)                       # (512, 128)
    b1s = jnp.concatenate([b1, b1]).reshape(1, 2 * HIDDEN).astype(jnp.float32)
    b2s = jnp.concatenate([b2, b2]).reshape(1, 2 * C).astype(jnp.float32)

    # Row-tile size in packed 128-lane rows. Big tiles amortize per-step overhead.
    align = 8 if comp_bytes == 4 else 16            # sublane packing for the dtype
    Mp_r = pl.cdiv(Mp, align) * align
    Tp = max(align, (min(block_rows // 2, Mp_r) // align) * align)
    # Keep >=2 grid steps when there is enough work so "parallel" can shard
    # across v7x's two TensorCores.
    if Mp_r // Tp < 2 and Mp_r >= 2 * align:
        Tp = max(align, ((Mp_r // 2) // align) * align)
    grid = (pl.cdiv(Mp, Tp),)   # ragged last block: reads padded, stores masked

    # VMEM budget: double-buffered x/out tiles + f32 hidden + resident weights.
    tile_bytes = (2 * Tp * 2 * C * comp_bytes           # x tile, double-buffered
                  + 2 * Tp * 2 * C * out_bytes          # out tile, double-buffered
                  + Tp * 2 * HIDDEN * 4                 # f32 hidden intermediate
                  + 2 * 2 * (2 * C) * (2 * HIDDEN) * comp_bytes   # W1s+W2s (x2 buf)
                  + 2 * (2 * HIDDEN + 2 * C) * 4)       # biases
    vmem_limit = int(min(64 * 1024 * 1024, max(32 * 1024 * 1024, 2 * tile_bytes)))

    flops = 4 * M * D_MODEL * HIDDEN                    # two matmuls, 2*M*K*N each
    bytes_accessed = (M * C * (comp_bytes + out_bytes)
                      + (2 * D_MODEL * HIDDEN + HIDDEN + D_MODEL) * comp_bytes)

    out_p = pl.pallas_call(
        _ffn_kernel,
        out_shape=jax.ShapeDtypeStruct((Mp, 2 * C), out_dtype),
        grid_spec=pltpu.PrefetchScalarGridSpec(
            num_scalar_prefetch=0,
            grid=grid,
            in_specs=[
                pl.BlockSpec((Tp, 2 * C), lambda i: (i, 0)),          # packed x row tile
                pl.BlockSpec((2 * C, 2 * HIDDEN), lambda i: (0, 0)),  # W1 (VMEM-resident)
                pl.BlockSpec((1, 2 * HIDDEN), lambda i: (0, 0)),      # b1
                pl.BlockSpec((2 * HIDDEN, 2 * C), lambda i: (0, 0)),  # W2 (VMEM-resident)
                pl.BlockSpec((1, 2 * C), lambda i: (0, 0)),           # b2
            ],
            out_specs=pl.BlockSpec((Tp, 2 * C), lambda i: (i, 0)),
        ),
        compiler_params=pltpu.CompilerParams(
            dimension_semantics=("parallel",),
            vmem_limit_bytes=vmem_limit),
        cost_estimate=pl.CostEstimate(flops=flops, transcendentals=0,
                                      bytes_accessed=bytes_accessed),
    )(xp, w1s, b1s, w2s, b2s)

    # Free bitcast back to (M, 64); drop the odd-M pad row if any.
    return out_p.reshape(2 * Mp, C)[:M].reshape(B, T, C)


def _reference(x, w1_t, b1, w2_t, b2):
    h = jnp.matmul(x, w1_t, precision=jax.lax.Precision.HIGHEST) + b1
    h = jnp.maximum(h, 0.0)
    return jnp.matmul(h, w2_t, precision=jax.lax.Precision.HIGHEST) + b2


if __name__ == "__main__":
    key = jax.random.PRNGKey(0)
    kx, k1, kb1, k2, kb2 = jax.random.split(key, 5)

    B, T = 2, 8
    x = jax.random.normal(kx, (B, T, D_MODEL), dtype=jnp.float32)

    # Deterministic nn.Linear-style init (uniform in [-1/sqrt(fan_in), +1/sqrt(fan_in)]),
    # stored directly in transposed (in_features, out_features) layout.
    bound1 = 1.0 / math.sqrt(D_MODEL)
    w1_t = jax.random.uniform(k1, (D_MODEL, HIDDEN), jnp.float32, -bound1, bound1)
    b1 = jax.random.uniform(kb1, (HIDDEN,), jnp.float32, -bound1, bound1)
    bound2 = 1.0 / math.sqrt(HIDDEN)
    w2_t = jax.random.uniform(k2, (HIDDEN, D_MODEL), jnp.float32, -bound2, bound2)
    b2 = jax.random.uniform(kb2, (D_MODEL,), jnp.float32, -bound2, bound2)

    # f32 path (matches PyTorch f32 semantics; block-diag trick is exact).
    out = jax.block_until_ready(ffn_forward(x, w1_t, b1, w2_t, b2))
    ref = _reference(x, w1_t, b1, w2_t, b2)
    assert out.shape == (B, T, D_MODEL)
    assert out.dtype == x.dtype
    assert jnp.allclose(out, ref, atol=1e-4, rtol=1e-4), "f32 mismatch vs reference"

    # bf16 path: bf16 MXU operands / HBM traffic, f32 accumulation, bf16 output.
    out_bf16 = jax.block_until_ready(
        ffn_forward(x.astype(jnp.bfloat16), w1_t, b1, w2_t, b2))
    assert out_bf16.dtype == jnp.bfloat16
    assert jnp.allclose(out_bf16.astype(jnp.float32), ref, atol=5e-2, rtol=5e-2), \
        "bf16 mismatch vs reference"

    print("KERNEL_OK")
</pallas_src>

<mosaic_0001>
module attributes {stable_mosaic.version = 11 : i64} {
  func.func @_ffn_kernel(%arg0: i32, %arg1: memref<8x128xf32, #tpu.memory_space<vmem>>, %arg2: memref<128x512xf32, #tpu.memory_space<vmem>>, %arg3: memref<1x512xf32, #tpu.memory_space<vmem>>, %arg4: memref<512x128xf32, #tpu.memory_space<vmem>>, %arg5: memref<1x128xf32, #tpu.memory_space<vmem>>, %arg6: memref<8x128xf32, #tpu.memory_space<vmem>>) attributes {dimension_semantics = [#tpu.dimension_semantics<parallel>], iteration_bounds = array<i64: 1>, scalar_prefetch = 0 : i64, scratch_operands = 0 : i64, tpu.core_type = #tpu.core_type<tc>, window_params = [{transform_indices = @transform_0, window_bounds = array<i64: 8, 128>}, {pipeline_mode = #tpu.pipeline_mode<synchronous>, transform_indices = @transform_1, window_bounds = array<i64: 128, 512>}, {pipeline_mode = #tpu.pipeline_mode<synchronous>, transform_indices = @transform_2, window_bounds = array<i64: 1, 512>}, {pipeline_mode = #tpu.pipeline_mode<synchronous>, transform_indices = @transform_3, window_bounds = array<i64: 512, 128>}, {pipeline_mode = #tpu.pipeline_mode<synchronous>, transform_indices = @transform_4, window_bounds = array<i64: 1, 128>}, {transform_indices = @transform_5, window_bounds = array<i64: 8, 128>}]} {
    %c0 = arith.constant 0 : index
    %c0_0 = arith.constant 0 : index
    %0 = vector.load %arg1[%c0, %c0_0] : memref<8x128xf32, #tpu.memory_space<vmem>>, vector<8x128xf32>
    %c0_1 = arith.constant 0 : index
    %c0_2 = arith.constant 0 : index
    %1 = vector.load %arg2[%c0_1, %c0_2] : memref<128x512xf32, #tpu.memory_space<vmem>>, vector<128x512xf32>
    %cst = arith.constant dense<0.000000e+00> : vector<8x512xf32>
    %2 = tpu.matmul %0, %1, %cst {dimension_numbers = #tpu.dot_dimension_numbers<[1], [0], [0], [1], [0, 0, 1, 1], [], []>} : vector<8x128xf32>, vector<128x512xf32>, vector<8x512xf32> -> vector<8x512xf32>
    %c0_3 = arith.constant 0 : index
    %c0_4 = arith.constant 0 : index
    %3 = vector.load %arg3[%c0_3, %c0_4] : memref<1x512xf32, #tpu.memory_space<vmem>>, vector<1x512xf32>
    %4 = vector.broadcast %3 : vector<1x512xf32> to vector<8x512xf32>
    %5 = arith.addf %2, %4 : vector<8x512xf32>
    %cst_5 = arith.constant 0.000000e+00 : f32
    %6 = vector.broadcast %cst_5 : f32 to vector<8x512xf32>
    %7 = arith.maximumf %5, %6 : vector<8x512xf32>
    %c0_6 = arith.constant 0 : index
    %c0_7 = arith.constant 0 : index
    %8 = vector.load %arg4[%c0_6, %c0_7] : memref<512x128xf32, #tpu.memory_space<vmem>>, vector<512x128xf32>
    %cst_8 = arith.constant dense<0.000000e+00> : vector<8x128xf32>
    %9 = tpu.matmul %7, %8, %cst_8 {dimension_numbers = #tpu.dot_dimension_numbers<[1], [0], [0], [1], [0, 0, 1, 1], [], []>} : vector<8x512xf32>, vector<512x128xf32>, vector<8x128xf32> -> vector<8x128xf32>
    %c0_9 = arith.constant 0 : index
    %c0_10 = arith.constant 0 : index
    %10 = vector.load %arg5[%c0_9, %c0_10] : memref<1x128xf32, #tpu.memory_space<vmem>>, vector<1x128xf32>
    %11 = vector.broadcast %10 : vector<1x128xf32> to vector<8x128xf32>
    %12 = arith.addf %9, %11 : vector<8x128xf32>
    %c0_11 = arith.constant 0 : index
    %c0_12 = arith.constant 0 : index
    %13 = vector.load %arg6[%c0_11, %c0_12] : memref<8x128xf32, #tpu.memory_space<vmem>>, vector<8x128xf32>
    tpu.vector_store %arg6[%c0_11, %c0_12], %12 {strides = array<i32>} : memref<8x128xf32, #tpu.memory_space<vmem>>, vector<8x128xf32>,
    return
  }
  func.func @transform_0(%arg0: i32) -> (i32, i32) {
    %c0_i32 = arith.constant 0 : i32
    %c0_i32_0 = arith.constant 0 : i32
    return %arg0, %c0_i32 : i32, i32
  }
  func.func @transform_1(%arg0: i32) -> (i32, i32) {
    %c0_i32 = arith.constant 0 : i32
    %c0_i32_0 = arith.constant 0 : i32
    %c0_i32_1 = arith.constant 0 : i32
    return %c0_i32, %c0_i32_0 : i32, i32
  }
  func.func @transform_2(%arg0: i32) -> (i32, i32) {
    %c0_i32 = arith.constant 0 : i32
    %c0_i32_0 = arith.constant 0 : i32
    %c0_i32_1 = arith.constant 0 : i32
    return %c0_i32, %c0_i32_0 : i32, i32
  }
  func.func @transform_3(%arg0: i32) -> (i32, i32) {
    %c0_i32 = arith.constant 0 : i32
    %c0_i32_0 = arith.constant 0 : i32
    %c0_i32_1 = arith.constant 0 : i32
    return %c0_i32, %c0_i32_0 : i32, i32
  }
  func.func @transform_4(%arg0: i32) -> (i32, i32) {
    %c0_i32 = arith.constant 0 : i32
    %c0_i32_0 = arith.constant 0 : i32
    %c0_i32_1 = arith.constant 0 : i32
    return %c0_i32, %c0_i32_0 : i32, i32
  }
  func.func @transform_5(%arg0: i32) -> (i32, i32) {
    %c0_i32 = arith.constant 0 : i32
    %c0_i32_0 = arith.constant 0 : i32
    return %arg0, %c0_i32 : i32, i32
  }
}

</mosaic_0001>

<llo_original>
// kernel: tpu_custom_call.1
$region0: #{tpu_custom_call.1}
  #allocation0 [shape = 'u32[]', space=smem, size = 0x4, offset = 0x4, fixed_abs, tag = 'smem constant byte address 0x4 - core index']
  #allocation1 [shape = 'u32[144,128]{1,0:T(1,128)}', space=vmem, size = 0x12000, scoped, tag = 'internal scratch']
  %s0 = inlined_call_operand.hbm [shape: f32[8,128], index: 0, kind: input, shape index: {}]
  %s1 = inlined_call_operand.hbm [shape: f32[128,512], index: 1, kind: input, shape index: {}]
  %s2 = inlined_call_operand.hbm [shape: f32[1,512], index: 2, kind: input, shape index: {}]
  %s3 = inlined_call_operand.hbm [shape: f32[512,128], index: 3, kind: input, shape index: {}]
  %s4 = inlined_call_operand.vmem [shape: f32[1,128], index: 4, kind: input, shape index: {}]
  %s5 = inlined_call_operand.hbm [shape: f32[8,128], index: 5, kind: output, shape index: {}]
  %s6 = sld [smem:[#allocation0]]
  $region46: #{tpu_custom_call.1} parent=0
    _
  %s8 = ssub.s32 1, %s6
  %s9 = scalar_select 0, %s8, %s6
  $region1: #{tpu_custom_call.1} parent=0
    #allocation2 [shape = 'u8[4096]{0}', space=vmem, size = 0x1000, scoped, tag = 'input window, operand 0, single buffered']
    #allocation3 [shape = 's32[1]{0}', space=sflag, size = 0x4, scoped, tag = 'scoped memory for tpu_custom_call.1']
    #allocation4 [shape = 's32[1]{0}', space=sflag, size = 0x4, scoped, tag = 'scoped memory for tpu_custom_call.1']
    #allocation5 [shape = 'u8[262144]{0}', space=vmem, size = 0x40000, scoped, tag = 'input window, operand 1, single buffered']
    #allocation6 [shape = 's32[1]{0}', space=sflag, size = 0x4, scoped, tag = 'scoped memory for tpu_custom_call.1']
    #allocation7 [shape = 'u8[2048]{0}', space=vmem, size = 0x800, scoped, tag = 'input window, operand 2, single buffered']
    #allocation8 [shape = 'u8[262144]{0}', space=vmem, size = 0x40000, scoped, tag = 'input window, operand 3, single buffered']
    #allocation9 [shape = 's32[1]{0}', space=sflag, size = 0x4, scoped, tag = 'scoped memory for tpu_custom_call.1']
    #allocation10 [shape = 'u8[4096]{0}', space=vmem, size = 0x1000, scoped, tag = 'output window, operand 0, single buffered']
    %10 = vsyncpa [#allocation3], 0
    %11 = vsyncpa [#allocation6], 0
    %12 = vsyncpa [#allocation9], 0
    %13 = vsyncpa [#allocation4], 0
    // Predicated region
    $region2: #{tpu_custom_call.1} parent=1 // pred_check
      _
    $region3: #{tpu_custom_call.1} parent=1 // pred_check_branch
      %15 = sbr.rel (0) target = $region5
    $region4: #{tpu_custom_call.1} parent=1 // pred_region
      %s17 = ssub.s32 128, 128
      %18 = vsyncadd [#allocation3], %s17
      %s20 = sshll.u32 [#allocation2], 4
      %s21 = int_to_ptr.vmem [resolvable:$true] %s20
      %23 = dma.hbm_to_vmem [thread:$0]  %s0, 128, %s21, [#allocation3]
    $region5: #{tpu_custom_call.1} parent=1 // pred_fallthru
      _
    // Predicated region
    $region6: #{tpu_custom_call.1} parent=1 // pred_check
      _
    $region7: #{tpu_custom_call.1} parent=1 // pred_check_branch
      %25 = sbr.rel (0) target = $region9
    $region8: #{tpu_custom_call.1} parent=1 // pred_region
      %s27 = ssub.s32 8192, 8192
      %28 = vsyncadd [#allocation6], %s27
      %s29 = sshll.u32 [#allocation5], 4
      %s30 = int_to_ptr.vmem [resolvable:$true] %s29
      %35 = dma.hbm_to_vmem [thread:$0]  %s1, 8192, %s30, [#allocation6], 512, 512, 32
    $region9: #{tpu_custom_call.1} parent=1 // pred_fallthru
      _
    // Predicated region
    $region10: #{tpu_custom_call.1} parent=1 // pred_check
      _
    $region11: #{tpu_custom_call.1} parent=1 // pred_check_branch
      %37 = sbr.rel (0) target = $region13
    $region12: #{tpu_custom_call.1} parent=1 // pred_region
      %s39 = ssub.s32 64, 64
      %40 = vsyncadd [#allocation6], %s39
      %s42 = sshll.u32 [#allocation7], 4
      %s43 = int_to_ptr.vmem [resolvable:$true] %s42
      %45 = dma.hbm_to_vmem [thread:$0]  %s2, 64, %s43, [#allocation6]
    $region13: #{tpu_custom_call.1} parent=1 // pred_fallthru
      _
    // Predicated region
    $region14: #{tpu_custom_call.1} parent=1 // pred_check
      _
    $region15: #{tpu_custom_call.1} parent=1 // pred_check_branch
      %47 = sbr.rel (0) target = $region17
    $region16: #{tpu_custom_call.1} parent=1 // pred_region
      %s49 = ssub.s32 8192, 8192
      %50 = vsyncadd [#allocation9], %s49
      %s51 = sshll.u32 [#allocation8], 4
      %s52 = int_to_ptr.vmem [resolvable:$true] %s51
      %57 = dma.hbm_to_vmem [thread:$0]  %s3, 8192, %s52, [#allocation9], 128, 128, 8
    $region17: #{tpu_custom_call.1} parent=1 // pred_fallthru
      _
    // Predicated region
    $region18: #{tpu_custom_call.1} parent=1 // pred_check
      _
    $region19: #{tpu_custom_call.1} parent=1 // pred_check_branch
      %59 = sbr.rel (0) target = $region21
    $region20: #{tpu_custom_call.1} parent=1 // pred_region
      _
    $region21: #{tpu_custom_call.1} parent=1 // pred_fallthru
      _
    // Predicated region
    $region22: #{tpu_custom_call.1} parent=1 // pred_check
      _
    $region23: #{tpu_custom_call.1} parent=1 // pred_check_branch
      %61 = sbr.rel (0) target = $region25
    $region24: #{tpu_custom_call.1} parent=1 // pred_region
      %62 = dma.done [#allocation3], 128
    $region25: #{tpu_custom_call.1} parent=1 // pred_fallthru
      _
    // Predicated region
    $region26: #{tpu_custom_call.1} parent=1 // pred_check
      _
    $region27: #{tpu_custom_call.1} parent=1 // pred_check_branch
      %64 = sbr.rel (0) target = $region29
    $region28: #{tpu_custom_call.1} parent=1 // pred_region
      %65 = dma.done [#allocation6], 8192
    $region29: #{tpu_custom_call.1} parent=1 // pred_fallthru
      _
    // Predicated region
    $region30: #{tpu_custom_call.1} parent=1 // pred_check
      _
    $region31: #{tpu_custom_call.1} parent=1 // pred_check_branch
      %67 = sbr.rel (0) target = $region33
    $region32: #{tpu_custom_call.1} parent=1 // pred_region
      %68 = dma.done [#allocation6], 64
    $region33: #{tpu_custom_call.1} parent=1 // pred_fallthru
      _
    // Predicated region
    $region34: #{tpu_custom_call.1} parent=1 // pred_check
      _
    $region35: #{tpu_custom_call.1} parent=1 // pred_check_branch
      %70 = sbr.rel (0) target = $region37
    $region36: #{tpu_custom_call.1} parent=1 // pred_region
      %71 = dma.done [#allocation9], 8192
    $region37: #{tpu_custom_call.1} parent=1 // pred_fallthru
      _
    %v72 = vld [vmem:[#allocation2] sm:$0xff]
    %v73 = vld [vmem:[#allocation5] sm:$0xff]
    %v74 = vld [vmem:[#allocation5 + $0x8] sm:$0xff]
    %v75 = vld [vmem:[#allocation5 + $0x10] sm:$0xff]
    %v76 = vld [vmem:[#allocation5 + $0x18] sm:$0xff]
    %v77 = vld [vmem:[#allocation5 + $0x20] sm:$0xff]
    %v78 = vld [vmem:[#allocation5 + $0x28] sm:$0xff]
    %v79 = vld [vmem:[#allocation5 + $0x30] sm:$0xff]
    %v80 = vld [vmem:[#allocation5 + $0x38] sm:$0xff]
    %v81 = vld [vmem:[#allocation5 + $0x40] sm:$0xff]
    %v82 = vld [vmem:[#allocation5 + $0x48] sm:$0xff]
    %v83 = vld [vmem:[#allocation5 + $0x50] sm:$0xff]
    %v84 = vld [vmem:[#allocation5 + $0x58] sm:$0xff]
    %v85 = vld [vmem:[#allocation5 + $0x60] sm:$0xff]
    %v86 = vld [vmem:[#allocation5 + $0x68] sm:$0xff]
    %v87 = vld [vmem:[#allocation5 + $0x70] sm:$0xff]
    %v88 = vld [vmem:[#allocation5 + $0x78] sm:$0xff]
    %v89 = vld [vmem:[#allocation5 + $0x80] sm:$0xff]
    %v90 = vld [vmem:[#allocation5 + $0x88] sm:$0xff]
    %v91 = vld [vmem:[#allocation5 + $0x90] sm:$0xff]
    %v92 = vld [vmem:[#allocation5 + $0x98] sm:$0xff]
    %v93 = vld [vmem:[#allocation5 + $0xa0] sm:$0xff]
    %v94 = vld [vmem:[#allocation5 + $0xa8] sm:$0xff]
    %v95 = vld [vmem:[#allocation5 + $0xb0] sm:$0xff]
    %v96 = vld [vmem:[#allocation5 + $0xb8] sm:$0xff]
    %v97 = vld [vmem:[#allocation5 + $0xc0] sm:$0xff]
    %v98 = vld [vmem:[#allocation5 + $0xc8] sm:$0xff]
    %v99 = vld [vmem:[#allocation5 + $0xd0] sm:$0xff]
    %v100 = vld [vmem:[#allocation5 + $0xd8] sm:$0xff]
    %v101 = vld [vmem:[#allocation5 + $0xe0] sm:$0xff]
    %v102 = vld [vmem:[#allocation5 + $0xe8] sm:$0xff]
    %v103 = vld [vmem:[#allocation5 + $0xf0] sm:$0xff]
    %v104 = vld [vmem:[#allocation5 + $0xf8] sm:$0xff]
    %v105 = vld [vmem:[#allocation5 + $0x100] sm:$0xff]
    %v106 = vld [vmem:[#allocation5 + $0x108] sm:$0xff]
    %v107 = vld [vmem:[#allocation5 + $0x110] sm:$0xff]
    %v108 = vld [vmem:[#allocation5 + $0x118] sm:$0xff]
    %v109 = vld [vmem:[#allocation5 + $0x120] sm:$0xff]
    %v110 = vld [vmem:[#allocation5 + $0x128] sm:$0xff]
    %v111 = vld [vmem:[#allocation5 + $0x130] sm:$0xff]
    %v112 = vld [vmem:[#allocation5 + $0x138] sm:$0xff]
    %v113 = vld [vmem:[#allocation5 + $0x140] sm:$0xff]
    %v114 = vld [vmem:[#allocation5 + $0x148] sm:$0xff]
    %v115 = vld [vmem:[#allocation5 + $0x150] sm:$0xff]
    %v116 = vld [vmem:[#allocation5 + $0x158] sm:$0xff]
    %v117 = vld [vmem:[#allocation5 + $0x160] sm:$0xff]
    %v118 = vld [vmem:[#allocation5 + $0x168] sm:$0xff]
    %v119 = vld [vmem:[#allocation5 + $0x170] sm:$0xff]
    %v120 = vld [vmem:[#allocation5 + $0x178] sm:$0xff]
    %v121 = vld [vmem:[#allocation5 + $0x180] sm:$0xff]
    %v122 = vld [vmem:[#allocation5 + $0x188] sm:$0xff]
    %v123 = vld [vmem:[#allocation5 + $0x190] sm:$0xff]
    %v124 = vld [vmem:[#allocation5 + $0x198] sm:$0xff]
    %v125 = vld [vmem:[#allocation5 + $0x1a0] sm:$0xff]
    %v126 = vld [vmem:[#allocation5 + $0x1a8] sm:$0xff]
    %v127 = vld [vmem:[#allocation5 + $0x1b0] sm:$0xff]
    %v128 = vld [vmem:[#allocation5 + $0x1b8] sm:$0xff]
    %v129 = vld [vmem:[#allocation5 + $0x1c0] sm:$0xff]
    %v130 = vld [vmem:[#allocation5 + $0x1c8] sm:$0xff]
    %v131 = vld [vmem:[#allocation5 + $0x1d0] sm:$0xff]
    %v132 = vld [vmem:[#allocation5 + $0x1d8] sm:$0xff]
    %v133 = vld [vmem:[#allocation5 + $0x1e0] sm:$0xff]
    %v134 = vld [vmem:[#allocation5 + $0x1e8] sm:$0xff]
    %v135 = vld [vmem:[#allocation5 + $0x1f0] sm:$0xff]
    %v136 = vld [vmem:[#allocation5 + $0x1f8] sm:$0xff]
    %v137 = vld [vmem:[#allocation7] sm:$0xf]
    %v139 = vlaneseq
    %v140 = vshrl.u32 %v139, 7
    %v141 = vsub.s32 0, %v140
    %v142 = vrot.slane %v137, %v141
    %v143 = vlaneseq
    %v144 = vshrl.u32 %v143, 7
    %v145 = vsub.s32 1, %v144
    %v146 = vrot.slane %v137, %v145
    %v147 = vlaneseq
    %v148 = vshrl.u32 %v147, 7
    %v149 = vsub.s32 2, %v148
    %v150 = vrot.slane %v137, %v149
    %v151 = vlaneseq
    %v152 = vshrl.u32 %v151, 7
    %v153 = vsub.s32 3, %v152
    %v154 = vrot.slane %v137, %v153
    %159 = vmatprep.subr.mxu0 %v134
    %160 = vmatpush1.msra.mxu0 %v133
    %161 = vmatprep.subr.mxu0 %v130
    %162 = vmatpush1.msra.mxu0 %v129
    %163 = vmatprep.subr.mxu0 %v126
    %164 = vmatpush1.msra.mxu0 %v125
    %165 = vmatprep.subr.mxu0 %v122
    %166 = vmatpush1.msra.mxu0 %v121
    %167 = vmatprep.subr.mxu0 %v118
    %168 = vmatpush1.msra.mxu0 %v117
    %169 = vmatprep.subr.mxu0 %v114
    %170 = vmatpush1.msra.mxu0 %v113
    %171 = vmatprep.subr.mxu0 %v110
    %172 = vmatpush1.msra.mxu0 %v109
    %173 = vmatprep.subr.mxu0 %v106
    %174 = vmatpush1.msra.mxu0 %v105
    %175 = vmatprep.subr.mxu0 %v102
    %176 = vmatpush1.msra.mxu0 %v101
    %177 = vmatprep.subr.mxu0 %v98
    %178 = vmatpush1.msra.mxu0 %v97
    %179 = vmatprep.subr.mxu0 %v94
    %180 = vmatpush1.msra.mxu0 %v93
    %181 = vmatprep.subr.mxu0 %v90
    %182 = vmatpush1.msra.mxu0 %v89
    %183 = vmatprep.subr.mxu0 %v86
    %184 = vmatpush1.msra.mxu0 %v85
    %185 = vmatprep.subr.mxu0 %v82
    %186 = vmatpush1.msra.mxu0 %v81
    %187 = vmatprep.subr.mxu0 %v78
    %188 = vmatpush1.msra.mxu0 %v77
    %189 = vmatprep.subr.mxu0 %v74
    %190 = vmatpush1.msra.mxu0 %v73
    %191 = vmatprep.subr.mxu0 0.0
    %192 = vmatpush2.msra.mxu0 0.0
    %193 = vmatprep.subr.mxu0 0.0
    %194 = vmatpush2.msra.mxu0 0.0
    %195 = vmatprep.subr.mxu0 0.0
    %196 = vmatpush2.msra.mxu0 0.0
    %197 = vmatprep.subr.mxu0 0.0
    %198 = vmatpush2.msra.mxu0 0.0
    %199 = vmatprep.subr.mxu0 0.0
    %200 = vmatpush2.msra.mxu0 0.0
    %201 = vmatprep.subr.mxu0 0.0
    %202 = vmatpush2.msra.mxu0 0.0
    %203 = vmatprep.subr.mxu0 0.0
    %204 = vmatpush2.msra.mxu0 0.0
    %205 = vmatprep.subr.mxu0 0.0
    %206 = vmatpush2.msra.mxu0 0.0
    %207 = vmatprep.subr.mxu0 0.0
    %208 = vmatpush2.msra.mxu0 0.0
    %209 = vmatprep.subr.mxu0 0.0
    %210 = vmatpush2.msra.mxu0 0.0
    %211 = vmatprep.subr.mxu0 0.0
    %212 = vmatpush2.msra.mxu0 0.0
    %213 = vmatprep.subr.mxu0 0.0
    %214 = vmatpush2.msra.mxu0 0.0
    %215 = vmatprep.subr.mxu0 0.0
    %216 = vmatpush2.msra.mxu0 0.0
    %217 = vmatprep.subr.mxu0 0.0
    %218 = vmatpush2.msra.mxu0 0.0
    %219 = vmatprep.subr.mxu0 0.0
    %220 = vmatpush2.msra.mxu0 0.0
    %221 = vmatprep.subr.mxu0 0.0
    %222 = vmatpush2.msra.mxu0 0.0
    %223 = vmatprep.mubr.f32.mxu0 0.0
    %224 = vmatmul.mubr.f32.gmra.mxu0 %v72
    %v225 = vpop.f32.mrf.mxu0
    %v226 = vadd.f32 %v142, %v225
    %v227 = vpop.f32.mrf.mxu0
    %v228 = vadd.f32 %v146, %v227
    %229 = vdwg.mxu0
    %230 = vmatprep.subr.mxu0 %v136
    %231 = vmatpush1.msra.mxu0 %v135
    %232 = vmatprep.subr.mxu0 %v132
    %233 = vmatpush1.msra.mxu0 %v131
    %234 = vmatprep.subr.mxu0 %v128
    %235 = vmatpush1.msra.mxu0 %v127
    %236 = vmatprep.subr.mxu0 %v124
    %237 = vmatpush1.msra.mxu0 %v123
    %238 = vmatprep.subr.mxu0 %v120
    %239 = vmatpush1.msra.mxu0 %v119
    %240 = vmatprep.subr.mxu0 %v116
    %241 = vmatpush1.msra.mxu0 %v115
    %242 = vmatprep.subr.mxu0 %v112
    %243 = vmatpush1.msra.mxu0 %v111
    %244 = vmatprep.subr.mxu0 %v108
    %245 = vmatpush1.msra.mxu0 %v107
    %246 = vmatprep.subr.mxu0 %v104
    %247 = vmatpush1.msra.mxu0 %v103
    %248 = vmatprep.subr.mxu0 %v100
    %249 = vmatpush1.msra.mxu0 %v99
    %250 = vmatprep.subr.mxu0 %v96
    %251 = vmatpush1.msra.mxu0 %v95
    %252 = vmatprep.subr.mxu0 %v92
    %253 = vmatpush1.msra.mxu0 %v91
    %254 = vmatprep.subr.mxu0 %v88
    %255 = vmatpush1.msra.mxu0 %v87
    %256 = vmatprep.subr.mxu0 %v84
    %257 = vmatpush1.msra.mxu0 %v83
    %258 = vmatprep.subr.mxu0 %v80
    %259 = vmatpush1.msra.mxu0 %v79
    %260 = vmatprep.subr.mxu0 %v76
    %261 = vmatpush1.msra.mxu0 %v75
    %262 = vmatprep.subr.mxu0 0.0
    %263 = vmatpush2.msra.mxu0 0.0
    %264 = vmatprep.subr.mxu0 0.0
    %265 = vmatpush2.msra.mxu0 0.0
    %266 = vmatprep.subr.mxu0 0.0
    %267 = vmatpush2.msra.mxu0 0.0
    %268 = vmatprep.subr.mxu0 0.0
    %269 = vmatpush2.msra.mxu0 0.0
    %270 = vmatprep.subr.mxu0 0.0
    %271 = vmatpush2.msra.mxu0 0.0
    %272 = vmatprep.subr.mxu0 0.0
    %273 = vmatpush2.msra.mxu0 0.0
    %274 = vmatprep.subr.mxu0 0.0
    %275 = vmatpush2.msra.mxu0 0.0
    %276 = vmatprep.subr.mxu0 0.0
    %277 = vmatpush2.msra.mxu0 0.0
    %278 = vmatprep.subr.mxu0 0.0
    %279 = vmatpush2.msra.mxu0 0.0
    %280 = vmatprep.subr.mxu0 0.0
    %281 = vmatpush2.msra.mxu0 0.0
    %282 = vmatprep.subr.mxu0 0.0
    %283 = vmatpush2.msra.mxu0 0.0
    %284 = vmatprep.subr.mxu0 0.0
    %285 = vmatpush2.msra.mxu0 0.0
    %286 = vmatprep.subr.mxu0 0.0
    %287 = vmatpush2.msra.mxu0 0.0
    %288 = vmatprep.subr.mxu0 0.0
    %289 = vmatpush2.msra.mxu0 0.0
    %290 = vmatprep.subr.mxu0 0.0
    %291 = vmatpush2.msra.mxu0 0.0
    %292 = vmatprep.subr.mxu0 0.0
    %293 = vmatpush2.msra.mxu0 0.0
    %294 = vmatprep.mubr.f32.mxu0 0.0
    %295 = vmatmul.mubr.f32.gmra.mxu0 %v72
    %v296 = vpop.f32.mrf.mxu0
    %v297 = vadd.f32 %v150, %v296
    %v298 = vpop.f32.mrf.mxu0
    %v299 = vadd.f32 %v154, %v298
    %300 = vdwg.mxu0
    %v301 = vmax.f32 %v226, 0.0
    %v302 = vmax.f32 %v228, 0.0
    %v303 = vmax.f32 %v297, 0.0
    %v304 = vmax.f32 %v299, 0.0
    %v305 = vld [vmem:[#allocation8] sm:$0xff]
    %v306 = vld [vmem:[#allocation8 + $0x8] sm:$0xff]
    %v307 = vld [vmem:[#allocation8 + $0x10] sm:$0xff]
    %v308 = vld [vmem:[#allocation8 + $0x18] sm:$0xff]
    %v309 = vld [vmem:[#allocation8 + $0x20] sm:$0xff]
    %v310 = vld [vmem:[#allocation8 + $0x28] sm:$0xff]
    %v311 = vld [vmem:[#allocation8 + $0x30] sm:$0xff]
    %v312 = vld [vmem:[#allocation8 + $0x38] sm:$0xff]
    %v313 = vld [vmem:[#allocation8 + $0x40] sm:$0xff]
    %v314 = vld [vmem:[#allocation8 + $0x48] sm:$0xff]
    %v315 = vld [vmem:[#allocation8 + $0x50] sm:$0xff]
    %v316 = vld [vmem:[#allocation8 + $0x58] sm:$0xff]
    %v317 = vld [vmem:[#allocation8 + $0x60] sm:$0xff]
    %v318 = vld [vmem:[#allocation8 + $0x68] sm:$0xff]
    %v319 = vld [vmem:[#allocation8 + $0x70] sm:$0xff]
    %v320 = vld [vmem:[#allocation8 + $0x78] sm:$0xff]
    %v321 = vld [vmem:[#allocation8 + $0x80] sm:$0xff]
    %v322 = vld [vmem:[#allocation8 + $0x88] sm:$0xff]
    %v323 = vld [vmem:[#allocation8 + $0x90] sm:$0xff]
    %v324 = vld [vmem:[#allocation8 + $0x98] sm:$0xff]
    %v325 = vld [vmem:[#allocation8 + $0xa0] sm:$0xff]
    %v326 = vld [vmem:[#allocation8 + $0xa8] sm:$0xff]
    %v327 = vld [vmem:[#allocation8 + $0xb0] sm:$0xff]
    %v328 = vld [vmem:[#allocation8 + $0xb8] sm:$0xff]
    %v329 = vld [vmem:[#allocation8 + $0xc0] sm:$0xff]
    %v330 = vld [vmem:[#allocation8 + $0xc8] sm:$0xff]
    %v331 = vld [vmem:[#allocation8 + $0xd0] sm:$0xff]
    %v332 = vld [vmem:[#allocation8 + $0xd8] sm:$0xff]
    %v333 = vld [vmem:[#allocation8 + $0xe0] sm:$0xff]
    %v334 = vld [vmem:[#allocation8 + $0xe8] sm:$0xff]
    %v335 = vld [vmem:[#allocation8 + $0xf0] sm:$0xff]
    %v336 = vld [vmem:[#allocation8 + $0xf8] sm:$0xff]
    %v337 = vld [vmem:[#allocation8 + $0x100] sm:$0xff]
    %v338 = vld [vmem:[#allocation8 + $0x108] sm:$0xff]
    %v339 = vld [vmem:[#allocation8 + $0x110] sm:$0xff]
    %v340 = vld [vmem:[#allocation8 + $0x118] sm:$0xff]
    %v341 = vld [vmem:[#allocation8 + $0x120] sm:$0xff]
    %v342 = vld [vmem:[#allocation8 + $0x128] sm:$0xff]
    %v343 = vld [vmem:[#allocation8 + $0x130] sm:$0xff]
    %v344 = vld [vmem:[#allocation8 + $0x138] sm:$0xff]
    %v345 = vld [vmem:[#allocation8 + $0x140] sm:$0xff]
    %v346 = vld [vmem:[#allocation8 + $0x148] sm:$0xff]
    %v347 = vld [vmem:[#allocation8 + $0x150] sm:$0xff]
    %v348 = vld [vmem:[#allocation8 + $0x158] sm:$0xff]
    %v349 = vld [vmem:[#allocation8 + $0x160] sm:$0xff]
    %v350 = vld [vmem:[#allocation8 + $0x168] sm:$0xff]
    %v351 = vld [vmem:[#allocation8 + $0x170] sm:$0xff]
    %v352 = vld [vmem:[#allocation8 + $0x178] sm:$0xff]
    %v353 = vld [vmem:[#allocation8 + $0x180] sm:$0xff]
    %v354 = vld [vmem:[#allocation8 + $0x188] sm:$0xff]
    %v355 = vld [vmem:[#allocation8 + $0x190] sm:$0xff]
    %v356 = vld [vmem:[#allocation8 + $0x198] sm:$0xff]
    %v357 = vld [vmem:[#allocation8 + $0x1a0] sm:$0xff]
    %v358 = vld [vmem:[#allocation8 + $0x1a8] sm:$0xff]
    %v359 = vld [vmem:[#allocation8 + $0x1b0] sm:$0xff]
    %v360 = vld [vmem:[#allocation8 + $0x1b8] sm:$0xff]
    %v361 = vld [vmem:[#allocation8 + $0x1c0] sm:$0xff]
    %v362 = vld [vmem:[#allocation8 + $0x1c8] sm:$0xff]
    %v363 = vld [vmem:[#allocation8 + $0x1d0] sm:$0xff]
    %v364 = vld [vmem:[#allocation8 + $0x1d8] sm:$0xff]
    %v365 = vld [vmem:[#allocation8 + $0x1e0] sm:$0xff]
    %v366 = vld [vmem:[#allocation8 + $0x1e8] sm:$0xff]
    %v367 = vld [vmem:[#allocation8 + $0x1f0] sm:$0xff]
    %v368 = vld [vmem:[#allocation8 + $0x1f8] sm:$0xff]
    %v369 = vld [vmem:[%s4] sm:$0x1]
    %v371 = vlaneseq
    %v372 = vshrl.u32 %v371, 7
    %v373 = vsub.s32 0, %v372
    %v374 = vrot.slane %v369, %v373
    %376 = vmatprep.subr.mxu0 0.0
    %377 = vmatpush1.msra.mxu0 %v320
    %378 = vmatprep.subr.mxu0 0.0
    %379 = vmatpush1.msra.mxu0 %v319
    %380 = vmatprep.subr.mxu0 0.0
    %381 = vmatpush1.msra.mxu0 %v318
    %382 = vmatprep.subr.mxu0 0.0
    %383 = vmatpush1.msra.mxu0 %v317
    %384 = vmatprep.subr.mxu0 0.0
    %385 = vmatpush1.msra.mxu0 %v316
    %386 = vmatprep.subr.mxu0 0.0
    %387 = vmatpush1.msra.mxu0 %v315
    %388 = vmatprep.subr.mxu0 0.0
    %389 = vmatpush1.msra.mxu0 %v314
    %390 = vmatprep.subr.mxu0 0.0
    %391 = vmatpush1.msra.mxu0 %v313
    %392 = vmatprep.subr.mxu0 0.0
    %393 = vmatpush1.msra.mxu0 %v312
    %394 = vmatprep.subr.mxu0 0.0
    %395 = vmatpush1.msra.mxu0 %v311
    %396 = vmatprep.subr.mxu0 0.0
    %397 = vmatpush1.msra.mxu0 %v310
    %398 = vmatprep.subr.mxu0 0.0
    %399 = vmatpush1.msra.mxu0 %v309
    %400 = vmatprep.subr.mxu0 0.0
    %401 = vmatpush1.msra.mxu0 %v308
    %402 = vmatprep.subr.mxu0 0.0
    %403 = vmatpush1.msra.mxu0 %v307
    %404 = vmatprep.subr.mxu0 0.0
    %405 = vmatpush1.msra.mxu0 %v306
    %406 = vmatprep.subr.mxu0 0.0
    %407 = vmatpush1.msra.mxu0 %v305
    %408 = vmatprep.subr.mxu0 0.0
    %409 = vmatpush2.msra.mxu0 %v336
    %410 = vmatprep.subr.mxu0 0.0
    %411 = vmatpush2.msra.mxu0 %v335
    %412 = vmatprep.subr.mxu0 0.0
    %413 = vmatpush2.msra.mxu0 %v334
    %414 = vmatprep.subr.mxu0 0.0
    %415 = vmatpush2.msra.mxu0 %v333
    %416 = vmatprep.subr.mxu0 0.0
    %417 = vmatpush2.msra.mxu0 %v332
    %418 = vmatprep.subr.mxu0 0.0
    %419 = vmatpush2.msra.mxu0 %v331
    %420 = vmatprep.subr.mxu0 0.0
    %421 = vmatpush2.msra.mxu0 %v330
    %422 = vmatprep.subr.mxu0 0.0
    %423 = vmatpush2.msra.mxu0 %v329
    %424 = vmatprep.subr.mxu0 0.0
    %425 = vmatpush2.msra.mxu0 %v328
    %426 = vmatprep.subr.mxu0 0.0
    %427 = vmatpush2.msra.mxu0 %v327
    %428 = vmatprep.subr.mxu0 0.0
    %429 = vmatpush2.msra.mxu0 %v326
    %430 = vmatprep.subr.mxu0 0.0
    %431 = vmatpush2.msra.mxu0 %v325
    %432 = vmatprep.subr.mxu0 0.0
    %433 = vmatpush2.msra.mxu0 %v324
    %434 = vmatprep.subr.mxu0 0.0
    %435 = vmatpush2.msra.mxu0 %v323
    %436 = vmatprep.subr.mxu0 0.0
    %437 = vmatpush2.msra.mxu0 %v322
    %438 = vmatprep.subr.mxu0 0.0
    %439 = vmatpush2.msra.mxu0 %v321
    %440 = vmatprep.mubr.f32.mxu0 %v302
    %441 = vmatmul.mubr.f32.gmra.mxu0 %v301
    %v442 = vpop.f32.mrf.mxu0
    %v443 = vadd.f32 %v374, %v442
    %v444 = vpop.f32.mrf.mxu0
    %445 = vdwg.mxu0
    %446 = vmatprep.subr.mxu0 0.0
    %447 = vmatpush1.msra.mxu0 %v352
    %448 = vmatprep.subr.mxu0 0.0
    %449 = vmatpush1.msra.mxu0 %v351
    %450 = vmatprep.subr.mxu0 0.0
    %451 = vmatpush1.msra.mxu0 %v350
    %452 = vmatprep.subr.mxu0 0.0
    %453 = vmatpush1.msra.mxu0 %v349
    %454 = vmatprep.subr.mxu0 0.0
    %455 = vmatpush1.msra.mxu0 %v348
    %456 = vmatprep.subr.mxu0 0.0
    %457 = vmatpush1.msra.mxu0 %v347
    %458 = vmatprep.subr.mxu0 0.0
    %459 = vmatpush1.msra.mxu0 %v346
    %460 = vmatprep.subr.mxu0 0.0
    %461 = vmatpush1.msra.mxu0 %v345
    %462 = vmatprep.subr.mxu0 0.0
    %463 = vmatpush1.msra.mxu0 %v344
    %464 = vmatprep.subr.mxu0 0.0
    %465 = vmatpush1.msra.mxu0 %v343
    %466 = vmatprep.subr.mxu0 0.0
    %467 = vmatpush1.msra.mxu0 %v342
    %468 = vmatprep.subr.mxu0 0.0
    %469 = vmatpush1.msra.mxu0 %v341
    %470 = vmatprep.subr.mxu0 0.0
    %471 = vmatpush1.msra.mxu0 %v340
    %472 = vmatprep.subr.mxu0 0.0
    %473 = vmatpush1.msra.mxu0 %v339
    %474 = vmatprep.subr.mxu0 0.0
    %475 = vmatpush1.msra.mxu0 %v338
    %476 = vmatprep.subr.mxu0 0.0
    %477 = vmatpush1.msra.mxu0 %v337
    %478 = vmatprep.subr.mxu0 0.0
    %479 = vmatpush2.msra.mxu0 %v368
    %480 = vmatprep.subr.mxu0 0.0
    %481 = vmatpush2.msra.mxu0 %v367
    %482 = vmatprep.subr.mxu0 0.0
    %483 = vmatpush2.msra.mxu0 %v366
    %484 = vmatprep.subr.mxu0 0.0
    %485 = vmatpush2.msra.mxu0 %v365
    %486 = vmatprep.subr.mxu0 0.0
    %487 = vmatpush2.msra.mxu0 %v364
    %488 = vmatprep.subr.mxu0 0.0
    %489 = vmatpush2.msra.mxu0 %v363
    %490 = vmatprep.subr.mxu0 0.0
    %491 = vmatpush2.msra.mxu0 %v362
    %492 = vmatprep.subr.mxu0 0.0
    %493 = vmatpush2.msra.mxu0 %v361
    %494 = vmatprep.subr.mxu0 0.0
    %495 = vmatpush2.msra.mxu0 %v360
    %496 = vmatprep.subr.mxu0 0.0
    %497 = vmatpush2.msra.mxu0 %v359
    %498 = vmatprep.subr.mxu0 0.0
    %499 = vmatpush2.msra.mxu0 %v358
    %500 = vmatprep.subr.mxu0 0.0
    %501 = vmatpush2.msra.mxu0 %v357
    %502 = vmatprep.subr.mxu0 0.0
    %503 = vmatpush2.msra.mxu0 %v356
    %504 = vmatprep.subr.mxu0 0.0
    %505 = vmatpush2.msra.mxu0 %v355
    %506 = vmatprep.subr.mxu0 0.0
    %507 = vmatpush2.msra.mxu0 %v354
    %508 = vmatprep.subr.mxu0 0.0
    %509 = vmatpush2.msra.mxu0 %v353
    %510 = vmatprep.mubr.f32.mxu0 %v304
    %511 = vmatmul.mubr.f32.gmra.mxu0 %v303
    %v512 = vpop.f32.mrf.mxu0
    %v513 = vadd.f32 %v443, %v512
    %v514 = vpop.f32.mrf.mxu0
    %515 = vdwg.mxu0
    %516 = vst [vmem:[#allocation10] sm:$0xff] %v513
    // Predicated region
    $region38: #{tpu_custom_call.1} parent=1 // pred_check
      _
    $region39: #{tpu_custom_call.1} parent=1 // pred_check_branch
      %518 = sbr.rel (0) target = $region41
    $region40: #{tpu_custom_call.1} parent=1 // pred_region
      %s520 = ssub.s32 128, 128
      %521 = vsyncadd [#allocation4], %s520
      %s523 = sshll.u32 [#allocation10], 4
      %s524 = int_to_ptr.vmem [resolvable:$true] %s523
      %526 = dma.vmem_to_hbm [thread:$0]  %s524, 128, %s5, [#allocation4]
    $region41: #{tpu_custom_call.1} parent=1 // pred_fallthru
      _
    // Predicated region
    $region42: #{tpu_custom_call.1} parent=1 // pred_check
      _
    $region43: #{tpu_custom_call.1} parent=1 // pred_check_branch
      %528 = sbr.rel (0) target = $region45
    $region44: #{tpu_custom_call.1} parent=1 // pred_region
      %529 = dma.done [#allocation4], 128
    $region45: #{tpu_custom_call.1} parent=1 // pred_fallthru
      _
    %530 = vsyncpa [#allocation3], 1
    %531 = vsyncpa [#allocation6], 1
    %532 = vsyncpa [#allocation9], 1
    %533 = vsyncpa [#allocation4], 1

</llo_original>
